<compile_context>
chip_gen: v7x
topology: tpu7x:2x2x1
jax: 0.10.0
libtpu: 0.0.40
codegen_flags: <defaults>
</compile_context>

<pallas_src>
import functools

import jax
import jax.numpy as jnp
from jax.experimental import pallas as pl
from jax.experimental.pallas import tpu as pltpu

LANE = 128      # TPU lane width (last-dim alignment for hidden features)
SUBLANE = 8     # TPU sublane width (second-to-last dim alignment, f32)


def _round_up(x, m):
    return (x + m - 1) // m * m


def _critic_kernel(x_ref, w1_ref, b1_ref, w2_ref, b2_ref, w3_ref, b3_ref, o_ref):
    # x tile: [TB, in_features] f32, straight from HBM (no padding). Cast to
    # the MXU weight dtype (bf16 by default) on the VPU right before each dot;
    # accumulation and bias+relu stay in f32 (also safe on v5e's f32-only VPU).
    x = x_ref[...].astype(w1_ref.dtype)
    h1 = jnp.dot(x, w1_ref[...], preferred_element_type=jnp.float32) + b1_ref[...]
    h1 = jnp.maximum(h1, 0.0).astype(w2_ref.dtype)
    h2 = jnp.dot(h1, w2_ref[...], preferred_element_type=jnp.float32) + b2_ref[...]
    h2 = jnp.maximum(h2, 0.0)  # f32
    # Final layer has a single output unit: VPU multiply + lane reduction
    # (avoids an N=1 MXU matmul and a lane-padded output slab). w3_ref is the
    # single output row stored as [1, h2_p]; padded columns are exactly zero.
    y = jnp.sum(h2 * w3_ref[...], axis=-1, keepdims=True) + b3_ref[...]
    o_ref[...] = y.astype(o_ref.dtype)  # [TB, 1] store


@functools.partial(jax.jit, static_argnames=("block_b",))
def critic_forward(x, w1, b1, w2, b2, w3, b3, *, block_b=2048):
    """x: [B, input_size] (unpadded).

    Kernel params (from init_critic_params()["kernel"]):
      w1: [input_size, h1_p]   (bf16 or f32)   b1: [1, h1_p] f32
      w2: [h1_p, h2_p]         (bf16 or f32)   b2: [1, h2_p] f32
      w3: [1, h2_p] f32 (single output row)    b3: [1, 1]   f32
    """
    B, in_features = x.shape
    assert w1.shape[0] == in_features
    h1_p = w1.shape[1]
    h2_p = w2.shape[1]

    # Batch tile: big enough to amortize per-step pipeline overhead, but keep
    # >=2 grid steps when possible so v7x can shard the "parallel" batch axis
    # across its 2 TensorCores. No batch padding: ragged last block is masked.
    tb = min(block_b, max(SUBLANE, _round_up(pl.cdiv(B, 2), 256)))
    tb = min(tb, _round_up(B, SUBLANE))
    tb = _round_up(tb, SUBLANE)
    grid = (pl.cdiv(B, tb),)

    flops = 2 * B * (in_features * h1_p + h1_p * h2_p + h2_p)
    param_bytes = sum(a.size * a.dtype.itemsize for a in (w1, b1, w2, b2, w3, b3))
    bytes_accessed = x.size * x.dtype.itemsize + param_bytes + B * 4

    return pl.pallas_call(
        _critic_kernel,
        out_shape=jax.ShapeDtypeStruct((B, 1), jnp.float32),
        grid=grid,
        in_specs=[
            # x: tiled over batch; last block dim == full array dim (unpadded).
            pl.BlockSpec((tb, in_features), lambda i: (i, 0)),
            # Weights / biases: tiny and VMEM-resident across the whole grid.
            pl.BlockSpec((in_features, h1_p), lambda i: (0, 0)),
            pl.BlockSpec((1, h1_p), lambda i: (0, 0)),
            pl.BlockSpec((h1_p, h2_p), lambda i: (0, 0)),
            pl.BlockSpec((1, h2_p), lambda i: (0, 0)),
            pl.BlockSpec((1, h2_p), lambda i: (0, 0)),
            pl.BlockSpec((1, 1), lambda i: (0, 0)),
        ],
        out_specs=pl.BlockSpec((tb, 1), lambda i: (i, 0)),
        compiler_params=pltpu.CompilerParams(
            dimension_semantics=("parallel",),  # lets v7x split batch over 2 TCs
        ),
        cost_estimate=pl.CostEstimate(
            flops=flops, transcendentals=0, bytes_accessed=bytes_accessed),
    )(x, w1, b1, w2, b2, w3, b3)


def init_critic_params(key, input_size, hidden_size1, hidden_size2, *,
                       dtype=jnp.bfloat16):
    """torch.nn.Linear-style init (uniform +-1/sqrt(fan_in)), stored as [in, out].

    Returns:
      "logical": unpadded f32 params (for reference checks).
      "kernel" : params the kernel consumes — hidden (output) dims zero-padded
                 to 128 lanes (exact), x's contraction dim left unpadded, MXU
                 weights pre-cast once to `dtype`; biases and the final
                 single-output row stay f32.
    """
    h1_p = _round_up(hidden_size1, LANE)
    h2_p = _round_up(hidden_size2, LANE)
    ks = jax.random.split(key, 6)

    def linear(kw, kb, fan_in, fan_out):
        bound = 1.0 / jnp.sqrt(jnp.float32(fan_in))
        w = jax.random.uniform(kw, (fan_in, fan_out), jnp.float32, -bound, bound)
        b = jax.random.uniform(kb, (1, fan_out), jnp.float32, -bound, bound)
        return w, b

    w1, b1 = linear(ks[0], ks[1], input_size, hidden_size1)
    w2, b2 = linear(ks[2], ks[3], hidden_size1, hidden_size2)
    w3, b3 = linear(ks[4], ks[5], hidden_size2, 1)

    w1_k = jnp.zeros((input_size, h1_p), jnp.float32)
    w1_k = w1_k.at[:, :hidden_size1].set(w1).astype(dtype)
    b1_k = jnp.zeros((1, h1_p), jnp.float32).at[:, :hidden_size1].set(b1)

    w2_k = jnp.zeros((h1_p, h2_p), jnp.float32)
    w2_k = w2_k.at[:hidden_size1, :hidden_size2].set(w2).astype(dtype)
    b2_k = jnp.zeros((1, h2_p), jnp.float32).at[:, :hidden_size2].set(b2)

    w3_k = jnp.zeros((1, h2_p), jnp.float32).at[:, :hidden_size2].set(w3[:, 0])
    b3_k = b3  # [1, 1] f32

    return {
        "logical": (w1, b1, w2, b2, w3, b3),
        "kernel": (w1_k, b1_k, w2_k, b2_k, w3_k, b3_k),
    }


if __name__ == "__main__":
    # MADDPG critic shapes: input = concatenated joint observations + actions.
    input_size = 24
    hidden_size1 = 64
    hidden_size2 = 32

    key = jax.random.PRNGKey(0)
    kx, kp, kx2, kx3 = jax.random.split(key, 4)

    params_bf16 = init_critic_params(kp, input_size, hidden_size1, hidden_size2)
    params_f32 = init_critic_params(kp, input_size, hidden_size1, hidden_size2,
                                    dtype=jnp.float32)
    w1, b1, w2, b2, w3, b3 = params_bf16["logical"]

    def reference(x):
        h = jnp.maximum(x @ w1 + b1, 0.0)
        h = jnp.maximum(h @ w2 + b2, 0.0)
        return h @ w3 + b3

    # Small batch, f32 weights: exact-ish match.
    x_small = jax.random.normal(kx, (8, input_size), jnp.float32)
    out_f32 = jax.block_until_ready(critic_forward(x_small, *params_f32["kernel"]))
    assert out_f32.shape == (8, 1)
    assert jnp.allclose(out_f32, reference(x_small), atol=1e-5, rtol=1e-5)

    # Same batch, default bf16 MXU inputs (f32 accumulation): loose tolerance.
    out_bf16 = jax.block_until_ready(critic_forward(x_small, *params_bf16["kernel"]))
    assert jnp.allclose(out_bf16, reference(x_small), atol=3e-2, rtol=3e-2)

    # Non-tile-multiple batch: exercises the ragged-last-block (no padding) path
    # and a 2-step grid (both v7x TensorCores active).
    x_big = jax.random.normal(kx2, (300, input_size), jnp.float32)
    out_big = jax.block_until_ready(critic_forward(x_big, *params_bf16["kernel"]))
    assert out_big.shape == (300, 1)
    assert jnp.allclose(out_big, reference(x_big), atol=3e-2, rtol=3e-2)

    # Tiny non-sublane-multiple batch.
    x_tiny = jax.random.normal(kx3, (5, input_size), jnp.float32)
    out_tiny = jax.block_until_ready(critic_forward(x_tiny, *params_f32["kernel"]))
    assert out_tiny.shape == (5, 1)
    assert jnp.allclose(out_tiny, reference(x_tiny), atol=1e-5, rtol=1e-5)

    # TODO(synk): save_checkpoint / load_checkpoint and device selection are
    # host-side PyTorch utilities with no kernel equivalent; not translated.

    print("KERNEL_OK")
</pallas_src>

<mosaic_0001>
module attributes {stable_mosaic.version = 11 : i64} {
  func.func @_critic_kernel(%arg0: i32, %arg1: memref<8x24xf32, #tpu.memory_space<vmem>>, %arg2: memref<24x128xf32, #tpu.memory_space<vmem>>, %arg3: memref<1x128xf32, #tpu.memory_space<vmem>>, %arg4: memref<128x128xf32, #tpu.memory_space<vmem>>, %arg5: memref<1x128xf32, #tpu.memory_space<vmem>>, %arg6: memref<1x128xf32, #tpu.memory_space<vmem>>, %arg7: memref<1x1xf32, #tpu.memory_space<vmem>>, %arg8: memref<8x1xf32, #tpu.memory_space<vmem>>) attributes {dimension_semantics = [#tpu.dimension_semantics<parallel>], iteration_bounds = array<i64: 1>, scalar_prefetch = 0 : i64, scratch_operands = 0 : i64, tpu.core_type = #tpu.core_type<tc>, window_params = [{transform_indices = @transform_0, window_bounds = array<i64: 8, 24>}, {pipeline_mode = #tpu.pipeline_mode<synchronous>, transform_indices = @transform_1, window_bounds = array<i64: 24, 128>}, {pipeline_mode = #tpu.pipeline_mode<synchronous>, transform_indices = @transform_2, window_bounds = array<i64: 1, 128>}, {pipeline_mode = #tpu.pipeline_mode<synchronous>, transform_indices = @transform_3, window_bounds = array<i64: 128, 128>}, {pipeline_mode = #tpu.pipeline_mode<synchronous>, transform_indices = @transform_4, window_bounds = array<i64: 1, 128>}, {pipeline_mode = #tpu.pipeline_mode<synchronous>, transform_indices = @transform_5, window_bounds = array<i64: 1, 128>}, {pipeline_mode = #tpu.pipeline_mode<synchronous>, transform_indices = @transform_6, window_bounds = array<i64: 1, 1>}, {transform_indices = @transform_7, window_bounds = array<i64: 8, 1>}]} {
    %c0 = arith.constant 0 : index
    %c0_0 = arith.constant 0 : index
    %0 = vector.load %arg1[%c0, %c0_0] : memref<8x24xf32, #tpu.memory_space<vmem>>, vector<8x24xf32>
    %c0_1 = arith.constant 0 : index
    %c0_2 = arith.constant 0 : index
    %1 = vector.load %arg2[%c0_1, %c0_2] : memref<24x128xf32, #tpu.memory_space<vmem>>, vector<24x128xf32>
    %cst = arith.constant dense<0.000000e+00> : vector<8x128xf32>
    %2 = tpu.matmul %0, %1, %cst {dimension_numbers = #tpu.dot_dimension_numbers<[1], [0], [0], [1], [0, 0, 1, 1], [], []>} : vector<8x24xf32>, vector<24x128xf32>, vector<8x128xf32> -> vector<8x128xf32>
    %c0_3 = arith.constant 0 : index
    %c0_4 = arith.constant 0 : index
    %3 = vector.load %arg3[%c0_3, %c0_4] : memref<1x128xf32, #tpu.memory_space<vmem>>, vector<1x128xf32>
    %4 = vector.broadcast %3 : vector<1x128xf32> to vector<8x128xf32>
    %5 = arith.addf %2, %4 : vector<8x128xf32>
    %cst_5 = arith.constant 0.000000e+00 : f32
    %6 = vector.broadcast %cst_5 : f32 to vector<8x128xf32>
    %7 = arith.maximumf %5, %6 : vector<8x128xf32>
    %c0_6 = arith.constant 0 : index
    %c0_7 = arith.constant 0 : index
    %8 = vector.load %arg4[%c0_6, %c0_7] : memref<128x128xf32, #tpu.memory_space<vmem>>, vector<128x128xf32>
    %cst_8 = arith.constant dense<0.000000e+00> : vector<8x128xf32>
    %9 = tpu.matmul %7, %8, %cst_8 {dimension_numbers = #tpu.dot_dimension_numbers<[1], [0], [0], [1], [0, 0, 1, 1], [], []>} : vector<8x128xf32>, vector<128x128xf32>, vector<8x128xf32> -> vector<8x128xf32>
    %c0_9 = arith.constant 0 : index
    %c0_10 = arith.constant 0 : index
    %10 = vector.load %arg5[%c0_9, %c0_10] : memref<1x128xf32, #tpu.memory_space<vmem>>, vector<1x128xf32>
    %11 = vector.broadcast %10 : vector<1x128xf32> to vector<8x128xf32>
    %12 = arith.addf %9, %11 : vector<8x128xf32>
    %cst_11 = arith.constant 0.000000e+00 : f32
    %13 = vector.broadcast %cst_11 : f32 to vector<8x128xf32>
    %14 = arith.maximumf %12, %13 : vector<8x128xf32>
    %c0_12 = arith.constant 0 : index
    %c0_13 = arith.constant 0 : index
    %15 = vector.load %arg6[%c0_12, %c0_13] : memref<1x128xf32, #tpu.memory_space<vmem>>, vector<1x128xf32>
    %16 = vector.broadcast %15 : vector<1x128xf32> to vector<8x128xf32>
    %17 = arith.mulf %14, %16 : vector<8x128xf32>
    %cst_14 = arith.constant dense<0.000000e+00> : vector<8xf32>
    %18 = vector.multi_reduction <add>, %17, %cst_14 [1] : vector<8x128xf32> to vector<8xf32>
    %19 = vector.shape_cast %18 : vector<8xf32> to vector<8x1xf32>
    %c0_15 = arith.constant 0 : index
    %c0_16 = arith.constant 0 : index
    %20 = vector.load %arg7[%c0_15, %c0_16] : memref<1x1xf32, #tpu.memory_space<vmem>>, vector<1x1xf32>
    %21 = vector.broadcast %20 : vector<1x1xf32> to vector<8x1xf32>
    %22 = arith.addf %19, %21 : vector<8x1xf32>
    %c0_17 = arith.constant 0 : index
    %c0_18 = arith.constant 0 : index
    %23 = vector.load %arg8[%c0_17, %c0_18] : memref<8x1xf32, #tpu.memory_space<vmem>>, vector<8x1xf32>
    tpu.vector_store %arg8[%c0_17, %c0_18], %22 {strides = array<i32>} : memref<8x1xf32, #tpu.memory_space<vmem>>, vector<8x1xf32>,
    return
  }
  func.func @transform_0(%arg0: i32) -> (i32, i32) {
    %c0_i32 = arith.constant 0 : i32
    %c0_i32_0 = arith.constant 0 : i32
    return %arg0, %c0_i32 : i32, i32
  }
  func.func @transform_1(%arg0: i32) -> (i32, i32) {
    %c0_i32 = arith.constant 0 : i32
    %c0_i32_0 = arith.constant 0 : i32
    %c0_i32_1 = arith.constant 0 : i32
    return %c0_i32, %c0_i32_0 : i32, i32
  }
  func.func @transform_2(%arg0: i32) -> (i32, i32) {
    %c0_i32 = arith.constant 0 : i32
    %c0_i32_0 = arith.constant 0 : i32
    %c0_i32_1 = arith.constant 0 : i32
    return %c0_i32, %c0_i32_0 : i32, i32
  }
  func.func @transform_3(%arg0: i32) -> (i32, i32) {
    %c0_i32 = arith.constant 0 : i32
    %c0_i32_0 = arith.constant 0 : i32
    %c0_i32_1 = arith.constant 0 : i32
    return %c0_i32, %c0_i32_0 : i32, i32
  }
  func.func @transform_4(%arg0: i32) -> (i32, i32) {
    %c0_i32 = arith.constant 0 : i32
    %c0_i32_0 = arith.constant 0 : i32
    %c0_i32_1 = arith.constant 0 : i32
    return %c0_i32, %c0_i32_0 : i32, i32
  }
  func.func @transform_5(%arg0: i32) -> (i32, i32) {
    %c0_i32 = arith.constant 0 : i32
    %c0_i32_0 = arith.constant 0 : i32
    %c0_i32_1 = arith.constant 0 : i32
    return %c0_i32, %c0_i32_0 : i32, i32
  }
  func.func @transform_6(%arg0: i32) -> (i32, i32) {
    %c0_i32 = arith.constant 0 : i32
    %c0_i32_0 = arith.constant 0 : i32
    %c0_i32_1 = arith.constant 0 : i32
    return %c0_i32, %c0_i32_0 : i32, i32
  }
  func.func @transform_7(%arg0: i32) -> (i32, i32) {
    %c0_i32 = arith.constant 0 : i32
    %c0_i32_0 = arith.constant 0 : i32
    return %arg0, %c0_i32 : i32, i32
  }
}

</mosaic_0001>

<llo_original>
// kernel: critic_forward.1
$region0: #{critic_forward.1}
  #allocation0 [shape = 'u32[]', space=smem, size = 0x4, offset = 0x4, fixed_abs, tag = 'smem constant byte address 0x4 - core index']
  #allocation1 [shape = 'u32[144,128]{1,0:T(1,128)}', space=vmem, size = 0x12000, scoped, tag = 'internal scratch']
  #allocation2 [shape = 'f32[1,1]{1,0:T(1,128)S(1)}', space=vmem, size = 0x200, scoped, tag = 'scoped memory for critic_forward.1']
  %s0 = inlined_call_operand.hbm [shape: f32[8,24], index: 0, kind: input, shape index: {}]
  %s1 = inlined_call_operand.hbm [shape: f32[24,128], index: 1, kind: input, shape index: {}]
  %s2 = inlined_call_operand.vmem [shape: f32[1,128], index: 2, kind: input, shape index: {}]
  %s3 = inlined_call_operand.hbm [shape: f32[128,128], index: 3, kind: input, shape index: {}]
  %s4 = inlined_call_operand.vmem [shape: f32[1,128], index: 4, kind: input, shape index: {}]
  %s5 = inlined_call_operand.vmem [shape: f32[1,128], index: 5, kind: input, shape index: {}]
  %s6 = inlined_call_operand.<no memory space> [shape: f32[1,1], index: 6, kind: input, shape index: {}]
  %s7 = inlined_call_operand.vmem [shape: f32[8,1], index: 7, kind: output, shape index: {}]
  %s8 = sld [smem:[#allocation0]]
  $region50: #{critic_forward.1} parent=0
    _
  %s10 = ssub.s32 1, %s8
  %s11 = scalar_select 0, %s10, %s8
  %v12 = vstv %s6
  %13 = vst [vmem:[#allocation2] sm:$0x1] %v12
  $region1: #{critic_forward.1} parent=0
    #allocation3 [shape = 'u8[4096]{0}', space=vmem, size = 0x1000, scoped, tag = 'input window, operand 0, single buffered']
    #allocation4 [shape = 's32[1]{0}', space=sflag, size = 0x4, scoped, tag = 'scoped memory for critic_forward.1']
    #allocation5 [shape = 'u8[12288]{0}', space=vmem, size = 0x3000, scoped, tag = 'input window, operand 1, single buffered']
    #allocation6 [shape = 's32[1]{0}', space=sflag, size = 0x4, scoped, tag = 'scoped memory for critic_forward.1']
    #allocation7 [shape = 'u8[65536]{0}', space=vmem, size = 0x10000, scoped, tag = 'input window, operand 3, single buffered']
    %14 = vsyncpa [#allocation4], 0
    %15 = vsyncpa [#allocation6], 0
    // Predicated region
    $region2: #{critic_forward.1} parent=1 // pred_check
      _
    $region3: #{critic_forward.1} parent=1 // pred_check_branch
      %17 = sbr.rel (0) target = $region5
    $region4: #{critic_forward.1} parent=1 // pred_region
      %s19 = ssub.s32 128, 128
      %20 = vsyncadd [#allocation4], %s19
      %s22 = sshll.u32 [#allocation3], 4
      %s23 = int_to_ptr.vmem [resolvable:$true] %s22
      %25 = dma.hbm_to_vmem [thread:$0]  %s0, 128, %s23, [#allocation4]
    $region5: #{critic_forward.1} parent=1 // pred_fallthru
      _
    // Predicated region
    $region6: #{critic_forward.1} parent=1 // pred_check
      _
    $region7: #{critic_forward.1} parent=1 // pred_check_branch
      %27 = sbr.rel (0) target = $region9
    $region8: #{critic_forward.1} parent=1 // pred_region
      %s29 = ssub.s32 384, 384
      %30 = vsyncadd [#allocation6], %s29
      %s31 = sshll.u32 [#allocation5], 4
      %s32 = int_to_ptr.vmem [resolvable:$true] %s31
      %37 = dma.hbm_to_vmem [thread:$0]  %s1, 384, %s32, [#allocation6], 128, 128, 8
    $region9: #{critic_forward.1} parent=1 // pred_fallthru
      _
    // Predicated region
    $region10: #{critic_forward.1} parent=1 // pred_check
      _
    $region11: #{critic_forward.1} parent=1 // pred_check_branch
      %39 = sbr.rel (0) target = $region13
    $region12: #{critic_forward.1} parent=1 // pred_region
      _
    $region13: #{critic_forward.1} parent=1 // pred_fallthru
      _
    // Predicated region
    $region14: #{critic_forward.1} parent=1 // pred_check
      _
    $region15: #{critic_forward.1} parent=1 // pred_check_branch
      %41 = sbr.rel (0) target = $region17
    $region16: #{critic_forward.1} parent=1 // pred_region
      %s43 = ssub.s32 2048, 2048
      %44 = vsyncadd [#allocation6], %s43
      %s45 = sshll.u32 [#allocation7], 4
      %s46 = int_to_ptr.vmem [resolvable:$true] %s45
      %51 = dma.hbm_to_vmem [thread:$0]  %s3, 2048, %s46, [#allocation6], 128, 128, 8
    $region17: #{critic_forward.1} parent=1 // pred_fallthru
      _
    // Predicated region
    $region18: #{critic_forward.1} parent=1 // pred_check
      _
    $region19: #{critic_forward.1} parent=1 // pred_check_branch
      %53 = sbr.rel (0) target = $region21
    $region20: #{critic_forward.1} parent=1 // pred_region
      _
    $region21: #{critic_forward.1} parent=1 // pred_fallthru
      _
    // Predicated region
    $region22: #{critic_forward.1} parent=1 // pred_check
      _
    $region23: #{critic_forward.1} parent=1 // pred_check_branch
      %55 = sbr.rel (0) target = $region25
    $region24: #{critic_forward.1} parent=1 // pred_region
      _
    $region25: #{critic_forward.1} parent=1 // pred_fallthru
      _
    // Predicated region
    $region26: #{critic_forward.1} parent=1 // pred_check
      _
    $region27: #{critic_forward.1} parent=1 // pred_check_branch
      %57 = sbr.rel (0) target = $region29
    $region28: #{critic_forward.1} parent=1 // pred_region
      _
    $region29: #{critic_forward.1} parent=1 // pred_fallthru
      _
    // Predicated region
    $region30: #{critic_forward.1} parent=1 // pred_check
      _
    $region31: #{critic_forward.1} parent=1 // pred_check_branch
      %59 = sbr.rel (0) target = $region33
    $region32: #{critic_forward.1} parent=1 // pred_region
      %60 = dma.done [#allocation4], 128
    $region33: #{critic_forward.1} parent=1 // pred_fallthru
      _
    // Predicated region
    $region34: #{critic_forward.1} parent=1 // pred_check
      _
    $region35: #{critic_forward.1} parent=1 // pred_check_branch
      %62 = sbr.rel (0) target = $region37
    $region36: #{critic_forward.1} parent=1 // pred_region
      %63 = dma.done [#allocation6], 384
    $region37: #{critic_forward.1} parent=1 // pred_fallthru
      _
    // Predicated region
    $region38: #{critic_forward.1} parent=1 // pred_check
      _
    $region39: #{critic_forward.1} parent=1 // pred_check_branch
      %65 = sbr.rel (0) target = $region41
    $region40: #{critic_forward.1} parent=1 // pred_region
      %66 = dma.done [#allocation6], 2048
    $region41: #{critic_forward.1} parent=1 // pred_fallthru
      _
    %v67 = vld [vmem:[#allocation3] sm:$0xff]
    %v68 = vld [vmem:[#allocation5] sm:$0xff]
    %v69 = vld [vmem:[#allocation5 + $0x8] sm:$0xff]
    %v70 = vld [vmem:[#allocation5 + $0x10] sm:$0xff]
    %v71 = vld [vmem:[%s2] sm:$0x1]
    %v73 = vlaneseq
    %v74 = vshrl.u32 %v73, 7
    %v75 = vsub.s32 0, %v74
    %v76 = vrot.slane %v71, %v75
    %vm78 = vcmask 195584
    %v80 = vsel %vm78, %v67, 0
    %82 = vmatprep.subr.mxu0 0.0
    %83 = vmatpush1.msra.mxu0 %v68
    %84 = vmatprep.subr.mxu0 0.0
    %85 = vmatpush1.msra.mxu0 %v69
    %86 = vmatprep.subr.mxu0 0.0
    %87 = vmatpush1.msra.mxu0 %v70
    %88 = vmatprep.subr.mxu0 0.0
    %89 = vmatpush1.msra.mxu0 0.0
    %90 = vmatprep.subr.mxu0 0.0
    %91 = vmatpush1.msra.mxu0 0.0
    %92 = vmatprep.subr.mxu0 0.0
    %93 = vmatpush1.msra.mxu0 0.0
    %94 = vmatprep.subr.mxu0 0.0
    %95 = vmatpush1.msra.mxu0 0.0
    %96 = vmatprep.subr.mxu0 0.0
    %97 = vmatpush1.msra.mxu0 0.0
    %98 = vmatprep.subr.mxu0 0.0
    %99 = vmatpush1.msra.mxu0 0.0
    %100 = vmatprep.subr.mxu0 0.0
    %101 = vmatpush1.msra.mxu0 0.0
    %102 = vmatprep.subr.mxu0 0.0
    %103 = vmatpush1.msra.mxu0 0.0
    %104 = vmatprep.subr.mxu0 0.0
    %105 = vmatpush1.msra.mxu0 0.0
    %106 = vmatprep.subr.mxu0 0.0
    %107 = vmatpush1.msra.mxu0 0.0
    %108 = vmatprep.subr.mxu0 0.0
    %109 = vmatpush1.msra.mxu0 0.0
    %110 = vmatprep.subr.mxu0 0.0
    %111 = vmatpush1.msra.mxu0 0.0
    %112 = vmatprep.subr.mxu0 0.0
    %113 = vmatpush1.msra.mxu0 0.0
    %114 = vmatprep.subr.mxu0 0.0
    %115 = vmatpush1.msra.mxu0 0.0
    %116 = vmatprep.subr.mxu0 0.0
    %117 = vmatpush1.msra.mxu0 0.0
    %118 = vmatprep.subr.mxu0 0.0
    %119 = vmatpush1.msra.mxu0 0.0
    %120 = vmatprep.subr.mxu0 0.0
    %121 = vmatpush1.msra.mxu0 0.0
    %122 = vmatprep.subr.mxu0 0.0
    %123 = vmatpush1.msra.mxu0 0.0
    %124 = vmatprep.subr.mxu0 0.0
    %125 = vmatpush1.msra.mxu0 0.0
    %126 = vmatprep.subr.mxu0 0.0
    %127 = vmatpush1.msra.mxu0 0.0
    %128 = vmatprep.subr.mxu0 0.0
    %129 = vmatpush1.msra.mxu0 0.0
    %130 = vmatprep.subr.mxu0 0.0
    %131 = vmatpush1.msra.mxu0 0.0
    %132 = vmatprep.subr.mxu0 0.0
    %133 = vmatpush1.msra.mxu0 0.0
    %134 = vmatprep.subr.mxu0 0.0
    %135 = vmatpush1.msra.mxu0 0.0
    %136 = vmatprep.subr.mxu0 0.0
    %137 = vmatpush1.msra.mxu0 0.0
    %138 = vmatprep.subr.mxu0 0.0
    %139 = vmatpush1.msra.mxu0 0.0
    %140 = vmatprep.subr.mxu0 0.0
    %141 = vmatpush1.msra.mxu0 0.0
    %142 = vmatprep.subr.mxu0 0.0
    %143 = vmatpush1.msra.mxu0 0.0
    %144 = vmatprep.subr.mxu0 0.0
    %145 = vmatpush1.msra.mxu0 0.0
    %146 = vmatprep.mubr.f32.mxu0 0.0
    %147 = vmatmul.mubr.f32.gmra.mrb[0].mxu0 %v80
    %v148 = vpop.f32.mrb[0].mxu0
    %v149 = vadd.f32 %v76, %v148
    %v150 = vpop.f32.mrb[0].mxu0
    %151 = vdwg.mxu0
    %v152 = vmax.f32 %v149, 0.0
    %v153 = vld [vmem:[#allocation7] sm:$0xff]
    %v154 = vld [vmem:[#allocation7 + $0x8] sm:$0xff]
    %v155 = vld [vmem:[#allocation7 + $0x10] sm:$0xff]
    %v156 = vld [vmem:[#allocation7 + $0x18] sm:$0xff]
    %v157 = vld [vmem:[#allocation7 + $0x20] sm:$0xff]
    %v158 = vld [vmem:[#allocation7 + $0x28] sm:$0xff]
    %v159 = vld [vmem:[#allocation7 + $0x30] sm:$0xff]
    %v160 = vld [vmem:[#allocation7 + $0x38] sm:$0xff]
    %v161 = vld [vmem:[#allocation7 + $0x40] sm:$0xff]
    %v162 = vld [vmem:[#allocation7 + $0x48] sm:$0xff]
    %v163 = vld [vmem:[#allocation7 + $0x50] sm:$0xff]
    %v164 = vld [vmem:[#allocation7 + $0x58] sm:$0xff]
    %v165 = vld [vmem:[#allocation7 + $0x60] sm:$0xff]
    %v166 = vld [vmem:[#allocation7 + $0x68] sm:$0xff]
    %v167 = vld [vmem:[#allocation7 + $0x70] sm:$0xff]
    %v168 = vld [vmem:[#allocation7 + $0x78] sm:$0xff]
    %v169 = vld [vmem:[%s4] sm:$0x1]
    %v171 = vlaneseq
    %v172 = vshrl.u32 %v171, 7
    %v173 = vsub.s32 0, %v172
    %v174 = vrot.slane %v169, %v173
    %176 = vmatprep.subr.mxu0 0.0
    %177 = vmatpush1.msra.mxu0 %v153
    %178 = vmatprep.subr.mxu0 0.0
    %179 = vmatpush1.msra.mxu0 %v154
    %180 = vmatprep.subr.mxu0 0.0
    %181 = vmatpush1.msra.mxu0 %v155
    %182 = vmatprep.subr.mxu0 0.0
    %183 = vmatpush1.msra.mxu0 %v156
    %184 = vmatprep.subr.mxu0 0.0
    %185 = vmatpush1.msra.mxu0 %v157
    %186 = vmatprep.subr.mxu0 0.0
    %187 = vmatpush1.msra.mxu0 %v158
    %188 = vmatprep.subr.mxu0 0.0
    %189 = vmatpush1.msra.mxu0 %v159
    %190 = vmatprep.subr.mxu0 0.0
    %191 = vmatpush1.msra.mxu0 %v160
    %192 = vmatprep.subr.mxu0 0.0
    %193 = vmatpush1.msra.mxu0 %v161
    %194 = vmatprep.subr.mxu0 0.0
    %195 = vmatpush1.msra.mxu0 %v162
    %196 = vmatprep.subr.mxu0 0.0
    %197 = vmatpush1.msra.mxu0 %v163
    %198 = vmatprep.subr.mxu0 0.0
    %199 = vmatpush1.msra.mxu0 %v164
    %200 = vmatprep.subr.mxu0 0.0
    %201 = vmatpush1.msra.mxu0 %v165
    %202 = vmatprep.subr.mxu0 0.0
    %203 = vmatpush1.msra.mxu0 %v166
    %204 = vmatprep.subr.mxu0 0.0
    %205 = vmatpush1.msra.mxu0 %v167
    %206 = vmatprep.subr.mxu0 0.0
    %207 = vmatpush1.msra.mxu0 %v168
    %208 = vmatprep.subr.mxu0 0.0
    %209 = vmatpush1.msra.mxu0 0.0
    %210 = vmatprep.subr.mxu0 0.0
    %211 = vmatpush1.msra.mxu0 0.0
    %212 = vmatprep.subr.mxu0 0.0
    %213 = vmatpush1.msra.mxu0 0.0
    %214 = vmatprep.subr.mxu0 0.0
    %215 = vmatpush1.msra.mxu0 0.0
    %216 = vmatprep.subr.mxu0 0.0
    %217 = vmatpush1.msra.mxu0 0.0
    %218 = vmatprep.subr.mxu0 0.0
    %219 = vmatpush1.msra.mxu0 0.0
    %220 = vmatprep.subr.mxu0 0.0
    %221 = vmatpush1.msra.mxu0 0.0
    %222 = vmatprep.subr.mxu0 0.0
    %223 = vmatpush1.msra.mxu0 0.0
    %224 = vmatprep.subr.mxu0 0.0
    %225 = vmatpush1.msra.mxu0 0.0
    %226 = vmatprep.subr.mxu0 0.0
    %227 = vmatpush1.msra.mxu0 0.0
    %228 = vmatprep.subr.mxu0 0.0
    %229 = vmatpush1.msra.mxu0 0.0
    %230 = vmatprep.subr.mxu0 0.0
    %231 = vmatpush1.msra.mxu0 0.0
    %232 = vmatprep.subr.mxu0 0.0
    %233 = vmatpush1.msra.mxu0 0.0
    %234 = vmatprep.subr.mxu0 0.0
    %235 = vmatpush1.msra.mxu0 0.0
    %236 = vmatprep.subr.mxu0 0.0
    %237 = vmatpush1.msra.mxu0 0.0
    %238 = vmatprep.subr.mxu0 0.0
    %239 = vmatpush1.msra.mxu0 0.0
    %240 = vmatprep.mubr.f32.mxu0 0.0
    %241 = vmatmul.mubr.f32.gmra.mrb[0].mxu0 %v152
    %v242 = vpop.f32.mrb[0].mxu0
    %v243 = vadd.f32 %v174, %v242
    %v244 = vpop.f32.mrb[0].mxu0
    %245 = vdwg.mxu0
    %v246 = vmax.f32 %v243, 0.0
    %v247 = vld [vmem:[%s5] sm:$0x1]
    %v249 = vlaneseq
    %v250 = vshrl.u32 %v249, 7
    %v251 = vsub.s32 0, %v250
    %v252 = vrot.slane %v247, %v251
    %v254 = vmul.f32 %v246, %v252
    %255 = vadd.xlane.f32.xlu0 %v254
    %v256 = vpop.xlane.xlu0 %255
    %v257 = vld [vmem:[#allocation2] sm:$0x1]
    %v259 = vlaneseq
    %v260 = vshrl.u32 %v259, 7
    %v261 = vsub.s32 0, %v260
    %v262 = vrot.slane %v257, %v261
    %v264 = vadd.f32 %v256, %v262
    %vm265 = vcmask 7168
    %266 = vst.msk [vmem:[%s7] sm:$0xff] %vm265, %v264
    // Predicated region
    $region42: #{critic_forward.1} parent=1 // pred_check
      _
    $region43: #{critic_forward.1} parent=1 // pred_check_branch
      %268 = sbr.rel (0) target = $region45
    $region44: #{critic_forward.1} parent=1 // pred_region
      _
    $region45: #{critic_forward.1} parent=1 // pred_fallthru
      _
    // Predicated region
    $region46: #{critic_forward.1} parent=1 // pred_check
      _
    $region47: #{critic_forward.1} parent=1 // pred_check_branch
      %270 = sbr.rel (0) target = $region49
    $region48: #{critic_forward.1} parent=1 // pred_region
      _
    $region49: #{critic_forward.1} parent=1 // pred_fallthru
      _
    %271 = vsyncpa [#allocation4], 1
    %272 = vsyncpa [#allocation6], 1

</llo_original>
